<compile_context>
chip_gen: v7x
topology: tpu7x:2x2x1
jax: 0.10.0
libtpu: 0.0.40
codegen_flags: <defaults>
</compile_context>

<pallas_src>
import jax
import jax.numpy as jnp
from jax.experimental import pallas as pl
from jax.experimental.pallas import tpu as pltpu

LANES = 128
SUBLANES = 8
MIN_TILE = SUBLANES * LANES      # 1024 elements = one f32 vreg
MAX_BLOCK_ROWS = 1024            # (1024, 128) f32 block = 512 KiB per buffer


def _fold_to_vreg(v):
    """(block_rows, 128) -> (8, 128) partial sums (pure VPU vreg adds)."""
    return v.reshape(-1, SUBLANES, LANES).sum(axis=0)


def _make_bce_dice_kernel(rem_rows):
    """rem_rows: valid rows in the last grid block (0 => every block is full)."""

    def _partials(x, t):
        # One shared exp(-|x|) feeds both the stable BCE-with-logits and sigmoid.
        e = jnp.exp(-jnp.abs(x))
        bce = jnp.maximum(x, 0.0) - x * t + jnp.log1p(e)
        inv = 1.0 / (1.0 + e)
        p = jnp.where(x >= 0.0, inv, e * inv)   # == sigmoid(x)
        return bce, p

    def _emit(o_ref, bce, p, t):
        o_ref[0, 0] = _fold_to_vreg(bce)
        o_ref[0, 1] = _fold_to_vreg(p * t)
        o_ref[0, 2] = _fold_to_vreg(p)
        o_ref[0, 3] = _fold_to_vreg(t)

    def kernel(x_ref, t_ref, o_ref):
        x = x_ref[...].astype(jnp.float32)
        t = t_ref[...].astype(jnp.float32)

        if rem_rows == 0:
            bce, p = _partials(x, t)
            _emit(o_ref, bce, p, t)
        else:
            i = pl.program_id(0)
            last = pl.num_programs(0) - 1

            @pl.when(i != last)
            def _():
                bce, p = _partials(x, t)
                _emit(o_ref, bce, p, t)

            @pl.when(i == last)
            def _():
                # Rows >= rem_rows in the last block are Pallas overhang
                # (unspecified data); select them away with row-iota masks.
                mask = jax.lax.broadcasted_iota(jnp.int32, x.shape, 0) < rem_rows
                bce, p = _partials(x, t)
                bce_m = jnp.where(mask, bce, 0.0)
                p_m = jnp.where(mask, p, 0.0)
                t_m = jnp.where(mask, t, 0.0)
                _emit(o_ref, bce_m, p_m, t_m)

    return kernel


def _tail_sums(x, t):
    """Plain-JAX partial sums for the (<1024 element) ragged tail."""
    x = x.astype(jnp.float32)
    t = t.astype(jnp.float32)
    e = jnp.exp(-jnp.abs(x))
    bce = jnp.maximum(x, 0.0) - x * t + jnp.log1p(e)
    p = jnp.where(x >= 0.0, 1.0 / (1.0 + e), e / (1.0 + e))
    return jnp.stack([jnp.sum(bce), jnp.sum(p * t), jnp.sum(p), jnp.sum(t)])


@jax.jit
def bce_dice_loss(logits, targets):
    """Equivalent of BCEDiceLoss.forward(logits, targets)."""
    n = logits.size
    flat_x = logits.reshape(-1)
    flat_t = targets.reshape(-1)

    n_main = (n // MIN_TILE) * MIN_TILE   # whole-vreg part handled by the kernel
    tail = n - n_main

    sums = jnp.zeros((4,), jnp.float32)

    if n_main > 0:
        rows = n_main // LANES                      # multiple of 8
        block_rows = min(MAX_BLOCK_ROWS, rows)      # multiple of 8
        num_blocks = pl.cdiv(rows, block_rows)
        rem_rows = rows % block_rows                # valid rows in last block

        x_main = flat_x if tail == 0 else flat_x[:n_main]
        t_main = flat_t if tail == 0 else flat_t[:n_main]
        x2 = x_main.reshape(rows, LANES)            # native dtype, no copy/cast
        t2 = t_main.reshape(rows, LANES)

        tile_spec = pl.BlockSpec((block_rows, LANES), lambda i: (i, 0))
        out_spec = pl.BlockSpec((1, 4, SUBLANES, LANES), lambda i: (i, 0, 0, 0))

        partials = pl.pallas_call(
            _make_bce_dice_kernel(rem_rows),
            out_shape=jax.ShapeDtypeStruct(
                (num_blocks, 4, SUBLANES, LANES), jnp.float32),
            grid_spec=pltpu.PrefetchScalarGridSpec(
                num_scalar_prefetch=0,
                grid=(num_blocks,),
                in_specs=[tile_spec, tile_spec],
                out_specs=out_spec,
            ),
            compiler_params=pltpu.CompilerParams(
                dimension_semantics=("parallel",),
            ),
        )(x2, t2)

        # Final cross-lane/sublane/block reduction once, outside the kernel.
        sums = sums + partials.sum(axis=(0, 2, 3))

    if tail > 0:
        sums = sums + _tail_sums(flat_x[n_main:], flat_t[n_main:])

    bce_sum, intersection, p_sum, t_sum = sums[0], sums[1], sums[2], sums[3]
    bce = bce_sum / jnp.float32(n)   # F.binary_cross_entropy_with_logits: mean
    smooth = jnp.float32(1.0)
    dice = 1.0 - (2.0 * intersection + smooth) / (p_sum + t_sum + smooth)
    return bce + dice


def _reference(logits, targets):
    x = logits.astype(jnp.float32)
    t = targets.astype(jnp.float32)
    bce = jnp.mean(jnp.maximum(x, 0.0) - x * t + jnp.log1p(jnp.exp(-jnp.abs(x))))
    p = jax.nn.sigmoid(x).reshape(-1)
    tf = t.reshape(-1)
    inter = jnp.sum(p * tf)
    dice = 1.0 - (2.0 * inter + 1.0) / (jnp.sum(p) + jnp.sum(tf) + 1.0)
    return bce + dice


if __name__ == "__main__":
    key = jax.random.PRNGKey(0)
    k1, k2 = jax.random.split(key)
    # NCHW inputs, as a segmentation head would produce.
    logits = jax.random.normal(k1, (2, 4, 16, 16), dtype=jnp.float32)
    targets = (jax.random.uniform(k2, (2, 4, 16, 16)) > 0.5).astype(jnp.float32)

    loss = jax.block_until_ready(bce_dice_loss(logits, targets))

    ref = _reference(logits, targets)
    assert jnp.allclose(loss, ref, rtol=1e-5, atol=1e-5), (loss, ref)
    print("KERNEL_OK")
</pallas_src>

<mosaic_0001>
module attributes {stable_mosaic.version = 11 : i64} {
  func.func @kernel(%arg0: i32, %arg1: memref<16x128xf32, #tpu.memory_space<vmem>>, %arg2: memref<16x128xf32, #tpu.memory_space<vmem>>, %arg3: memref<1x4x8x128xf32, #tpu.memory_space<vmem>>) attributes {dimension_semantics = [#tpu.dimension_semantics<parallel>], iteration_bounds = array<i64: 1>, scalar_prefetch = 0 : i64, scratch_operands = 0 : i64, tpu.core_type = #tpu.core_type<tc>, window_params = [{transform_indices = @transform_0, window_bounds = array<i64: 16, 128>}, {transform_indices = @transform_1, window_bounds = array<i64: 16, 128>}, {transform_indices = @transform_2, window_bounds = array<i64: 1, 4, 8, 128>}]} {
    %c0 = arith.constant 0 : index
    %c0_0 = arith.constant 0 : index
    %0 = vector.load %arg1[%c0, %c0_0] : memref<16x128xf32, #tpu.memory_space<vmem>>, vector<16x128xf32>
    %c0_1 = arith.constant 0 : index
    %c0_2 = arith.constant 0 : index
    %1 = vector.load %arg2[%c0_1, %c0_2] : memref<16x128xf32, #tpu.memory_space<vmem>>, vector<16x128xf32>
    %2 = math.absf %0 : vector<16x128xf32>
    %cst = arith.constant 0.000000e+00 : f32
    %3 = vector.broadcast %cst : f32 to vector<16x128xf32>
    %4 = arith.subf %3, %2 : vector<16x128xf32>
    %5 = math.exp %4 : vector<16x128xf32>
    %cst_3 = arith.constant 0.000000e+00 : f32
    %6 = vector.broadcast %cst_3 : f32 to vector<16x128xf32>
    %7 = arith.maximumf %0, %6 : vector<16x128xf32>
    %8 = arith.mulf %0, %1 : vector<16x128xf32>
    %9 = arith.subf %7, %8 : vector<16x128xf32>
    %10 = math.log1p %5 : vector<16x128xf32>
    %11 = arith.addf %9, %10 : vector<16x128xf32>
    %cst_4 = arith.constant 1.000000e+00 : f32
    %12 = vector.broadcast %cst_4 : f32 to vector<16x128xf32>
    %13 = arith.addf %12, %5 : vector<16x128xf32>
    %cst_5 = arith.constant 1.000000e+00 : f32
    %14 = vector.broadcast %cst_5 : f32 to vector<16x128xf32>
    %15 = arith.divf %14, %13 : vector<16x128xf32>
    %cst_6 = arith.constant 0.000000e+00 : f32
    %16 = vector.broadcast %cst_6 : f32 to vector<16x128xf32>
    %17 = arith.cmpf oge, %0, %16 : vector<16x128xf32>
    %18 = arith.mulf %5, %15 : vector<16x128xf32>
    %19 = arith.select %17, %15, %18 : vector<16x128xi1>, vector<16x128xf32>
    %20 = vector.shape_cast %11 : vector<16x128xf32> to vector<2x8x128xf32>
    %cst_7 = arith.constant dense<0.000000e+00> : vector<8x128xf32>
    %21 = vector.multi_reduction <add>, %20, %cst_7 [0] : vector<2x8x128xf32> to vector<8x128xf32>
    %c0_8 = arith.constant 0 : index
    %c0_9 = arith.constant 0 : index
    %c0_10 = arith.constant 0 : index
    %c0_11 = arith.constant 0 : index
    %22 = vector.load %arg3[%c0_8, %c0_9, %c0_10, %c0_11] : memref<1x4x8x128xf32, #tpu.memory_space<vmem>>, vector<1x1x8x128xf32>
    %23 = vector.shape_cast %22 : vector<1x1x8x128xf32> to vector<8x128xf32>
    %24 = vector.shape_cast %21 : vector<8x128xf32> to vector<1x1x8x128xf32>
    tpu.vector_store %arg3[%c0_8, %c0_9, %c0_10, %c0_11], %24 {strides = array<i32>} : memref<1x4x8x128xf32, #tpu.memory_space<vmem>>, vector<1x1x8x128xf32>,
    %25 = arith.mulf %19, %1 : vector<16x128xf32>
    %26 = vector.shape_cast %25 : vector<16x128xf32> to vector<2x8x128xf32>
    %cst_12 = arith.constant dense<0.000000e+00> : vector<8x128xf32>
    %27 = vector.multi_reduction <add>, %26, %cst_12 [0] : vector<2x8x128xf32> to vector<8x128xf32>
    %c0_13 = arith.constant 0 : index
    %c1 = arith.constant 1 : index
    %c0_14 = arith.constant 0 : index
    %c0_15 = arith.constant 0 : index
    %28 = vector.load %arg3[%c0_13, %c1, %c0_14, %c0_15] : memref<1x4x8x128xf32, #tpu.memory_space<vmem>>, vector<1x1x8x128xf32>
    %29 = vector.shape_cast %28 : vector<1x1x8x128xf32> to vector<8x128xf32>
    %30 = vector.shape_cast %27 : vector<8x128xf32> to vector<1x1x8x128xf32>
    tpu.vector_store %arg3[%c0_13, %c1, %c0_14, %c0_15], %30 {strides = array<i32>} : memref<1x4x8x128xf32, #tpu.memory_space<vmem>>, vector<1x1x8x128xf32>,
    %31 = vector.shape_cast %19 : vector<16x128xf32> to vector<2x8x128xf32>
    %cst_16 = arith.constant dense<0.000000e+00> : vector<8x128xf32>
    %32 = vector.multi_reduction <add>, %31, %cst_16 [0] : vector<2x8x128xf32> to vector<8x128xf32>
    %c0_17 = arith.constant 0 : index
    %c2 = arith.constant 2 : index
    %c0_18 = arith.constant 0 : index
    %c0_19 = arith.constant 0 : index
    %33 = vector.load %arg3[%c0_17, %c2, %c0_18, %c0_19] : memref<1x4x8x128xf32, #tpu.memory_space<vmem>>, vector<1x1x8x128xf32>
    %34 = vector.shape_cast %33 : vector<1x1x8x128xf32> to vector<8x128xf32>
    %35 = vector.shape_cast %32 : vector<8x128xf32> to vector<1x1x8x128xf32>
    tpu.vector_store %arg3[%c0_17, %c2, %c0_18, %c0_19], %35 {strides = array<i32>} : memref<1x4x8x128xf32, #tpu.memory_space<vmem>>, vector<1x1x8x128xf32>,
    %36 = vector.shape_cast %1 : vector<16x128xf32> to vector<2x8x128xf32>
    %cst_20 = arith.constant dense<0.000000e+00> : vector<8x128xf32>
    %37 = vector.multi_reduction <add>, %36, %cst_20 [0] : vector<2x8x128xf32> to vector<8x128xf32>
    %c0_21 = arith.constant 0 : index
    %c3 = arith.constant 3 : index
    %c0_22 = arith.constant 0 : index
    %c0_23 = arith.constant 0 : index
    %38 = vector.load %arg3[%c0_21, %c3, %c0_22, %c0_23] : memref<1x4x8x128xf32, #tpu.memory_space<vmem>>, vector<1x1x8x128xf32>
    %39 = vector.shape_cast %38 : vector<1x1x8x128xf32> to vector<8x128xf32>
    %40 = vector.shape_cast %37 : vector<8x128xf32> to vector<1x1x8x128xf32>
    tpu.vector_store %arg3[%c0_21, %c3, %c0_22, %c0_23], %40 {strides = array<i32>} : memref<1x4x8x128xf32, #tpu.memory_space<vmem>>, vector<1x1x8x128xf32>,
    return
  }
  func.func @transform_0(%arg0: i32) -> (i32, i32) {
    %c0_i32 = arith.constant 0 : i32
    %c0_i32_0 = arith.constant 0 : i32
    return %arg0, %c0_i32 : i32, i32
  }
  func.func @transform_1(%arg0: i32) -> (i32, i32) {
    %c0_i32 = arith.constant 0 : i32
    %c0_i32_0 = arith.constant 0 : i32
    return %arg0, %c0_i32 : i32, i32
  }
  func.func @transform_2(%arg0: i32) -> (i32, i32, i32, i32) {
    %c0_i32 = arith.constant 0 : i32
    %c0_i32_0 = arith.constant 0 : i32
    %c0_i32_1 = arith.constant 0 : i32
    %c0_i32_2 = arith.constant 0 : i32
    return %arg0, %c0_i32, %c0_i32_0, %c0_i32_1 : i32, i32, i32, i32
  }
}

</mosaic_0001>

<llo_original>
// kernel: bce_dice_loss.1
$region0: #{bce_dice_loss.1}
  #allocation0 [shape = 'u32[]', space=smem, size = 0x4, offset = 0x4, fixed_abs, tag = 'smem constant byte address 0x4 - core index']
  #allocation1 [shape = 'u32[144,128]{1,0:T(1,128)}', space=vmem, size = 0x12000, scoped, tag = 'internal scratch']
  %s0 = inlined_call_operand.vmem [shape: f32[16,128], index: 0, kind: input, shape index: {}]
  %s1 = inlined_call_operand.vmem [shape: f32[16,128], index: 1, kind: input, shape index: {}]
  %s2 = inlined_call_operand.vmem [shape: f32[1,4,8,128], index: 2, kind: output, shape index: {}]
  %s3 = sld [smem:[#allocation0]]
  $region18: #{bce_dice_loss.1} parent=0
    _
  %s5 = ssub.s32 1, %s3
  %s6 = scalar_select 0, %s5, %s3
  // Predicated region
  $region2: #{bce_dice_loss.1} parent=0 // pred_check
    _
  $region3: #{bce_dice_loss.1} parent=0 // pred_check_branch
    %8 = sbr.rel (0) target = $region5
  $region4: #{bce_dice_loss.1} parent=0 // pred_region
    _
  $region5: #{bce_dice_loss.1} parent=0 // pred_fallthru
    _
  // Predicated region
  $region6: #{bce_dice_loss.1} parent=0 // pred_check
    _
  $region7: #{bce_dice_loss.1} parent=0 // pred_check_branch
    %10 = sbr.rel (0) target = $region9
  $region8: #{bce_dice_loss.1} parent=0 // pred_region
    _
  $region9: #{bce_dice_loss.1} parent=0 // pred_fallthru
    _
  %v11 = vld [vmem:[%s0] sm:$0xff]
  %v12 = vld [vmem:[%s0 + $0x8] sm:$0xff]
  %v13 = vld [vmem:[%s1] sm:$0xff]
  %v14 = vld [vmem:[%s1 + $0x8] sm:$0xff]
  %v15 = vand.u32 2147483647, %v11
  %v16 = vand.u32 2147483647, %v12
  %v17 = vsub.f32 0.0, %v15
  %v18 = vsub.f32 0.0, %v16
  %v19 = vmul.f32 %v17, 1.442695
  %v20 = vpow.pop %v19
  %v21 = vmul.f32 %v18, 1.442695
  %v22 = vpow.pop %v21
  %v23 = vmax.f32 %v11, 0.0
  %v24 = vmax.f32 %v12, 0.0
  %v25 = vmul.f32 %v11, %v13
  %v26 = vmul.f32 %v12, %v14
  %v27 = vsub.f32 %v23, %v25
  %v28 = vsub.f32 %v24, %v26
  %v29 = vadd.f32 %v20, 1.0
  %v30 = vlog2.pop %v29
  %v31 = vmul.f32 %v30, 0.6931472
  %v32 = vmul.f32 -0.5, %v20
  %v33 = vadd.f32 %v32, 1.0
  %v34 = vmul.f32 %v33, %v20
  %v35 = vand.u32 2147483647, %v20
  %vm36 = vcmp.lt.f32.partialorder %v35, 0.0004427343
  %v37 = vsel %vm36, %v34, %v31
  %v38 = vadd.f32 %v22, 1.0
  %v39 = vlog2.pop %v38
  %v40 = vmul.f32 %v39, 0.6931472
  %v41 = vmul.f32 -0.5, %v22
  %v42 = vadd.f32 %v41, 1.0
  %v43 = vmul.f32 %v42, %v22
  %v44 = vand.u32 2147483647, %v22
  %vm45 = vcmp.lt.f32.partialorder %v44, 0.0004427343
  %v46 = vsel %vm45, %v43, %v40
  %v47 = vadd.f32 %v27, %v37
  %v48 = vadd.f32 %v28, %v46
  %v49 = vadd.f32 %v20, 1.0
  %v50 = vadd.f32 %v22, 1.0
  %v51 = vrcp.pop %v49
  %v52 = vmul.f32 1.0, %v51
  %v53 = vrcp.pop %v50
  %v54 = vmul.f32 1.0, %v53
  %vm55 = vcmp.ge.f32.partialorder %v11, 0.0
  %vm56 = vcmp.ge.f32.partialorder %v12, 0.0
  %v57 = vmul.f32 %v20, %v52
  %v58 = vmul.f32 %v22, %v54
  %v59 = vsel %vm55, %v52, %v57
  %v60 = vsel %vm56, %v54, %v58
  %v61 = vadd.f32 %v47, %v48
  %62 = vst [vmem:[%s2] sm:$0xff] %v61
  %v63 = vmul.f32 %v59, %v13
  %v64 = vmul.f32 %v60, %v14
  %v65 = vadd.f32 %v63, %v64
  %s66 = scalar_lea.vmem %s2, 8
  %67 = vst [vmem:[%s66] sm:$0xff] %v65
  %v68 = vadd.f32 %v59, %v60
  %s69 = scalar_lea.vmem %s2, 16
  %70 = vst [vmem:[%s69] sm:$0xff] %v68
  %v71 = vadd.f32 %v13, %v14
  %s72 = scalar_lea.vmem %s2, 24
  %73 = vst [vmem:[%s72] sm:$0xff] %v71
  // Predicated region
  $region10: #{bce_dice_loss.1} parent=0 // pred_check
    _
  $region11: #{bce_dice_loss.1} parent=0 // pred_check_branch
    %75 = sbr.rel (0) target = $region13
  $region12: #{bce_dice_loss.1} parent=0 // pred_region
    _
  $region13: #{bce_dice_loss.1} parent=0 // pred_fallthru
    _
  // Predicated region
  $region14: #{bce_dice_loss.1} parent=0 // pred_check
    _
  $region15: #{bce_dice_loss.1} parent=0 // pred_check_branch
    %77 = sbr.rel (0) target = $region17
  $region16: #{bce_dice_loss.1} parent=0 // pred_region
    _
  $region17: #{bce_dice_loss.1} parent=0 // pred_fallthru
    _

</llo_original>
